<compile_context>
chip_gen: v7x
topology: tpu7x:2x2x1
jax: 0.10.0
libtpu: 0.0.40
codegen_flags: <defaults>
</compile_context>

<pallas_src>
import jax
import jax.numpy as jnp
from jax import lax
from jax.experimental import pallas as pl
from jax.experimental.pallas import tpu as pltpu


def _round_up(x, m):
    return ((x + m - 1) // m) * m


def linear_logsoftmax_kernel(x_ref, w_ref, b_ref, o_ref):
    # x_ref: [TB, D]   w_ref: [Cp, D]   b_ref: [1, Cp]   o_ref: [TB, Cp]
    x = x_ref[...]                         # native dtype -> MXU
    w = w_ref[...]                         # native dtype -> MXU
    b = b_ref[...].astype(jnp.float32)

    # x @ W^T on the MXU: contract x dim 1 with weight dim 1, f32 accumulate.
    logits = lax.dot_general(
        x, w,
        dimension_numbers=(((1,), (1,)), ((), ())),
        preferred_element_type=jnp.float32,
    ) + b                                  # [TB, Cp] f32

    # Numerically-stable log-softmax over the class axis.  Padded classes have
    # bias -1e30 so they never affect the max and exp(-1e30 - m) == 0.
    m = jnp.max(logits, axis=1, keepdims=True)                       # [TB, 1]
    shifted = logits - m                                             # [TB, Cp]
    lse = jnp.log(jnp.sum(jnp.exp(shifted), axis=1, keepdims=True))  # [TB, 1]
    o_ref[...] = (shifted - lse).astype(o_ref.dtype)


def prepare_params(weight, bias, lane=128):
    """One-time (init-time) prep: pad the class dim so the kernel's output is
    lane-dense (multiple of 128).  Padded rows of W are zero and padded bias is
    a huge negative number, so padded classes drop out of the log-softmax."""
    C, D = weight.shape
    Cp = max(lane, _round_up(C, lane))
    if Cp != C:
        weight = jnp.pad(weight, ((0, Cp - C), (0, 0)))
        bias = jnp.concatenate(
            [bias, jnp.full((Cp - C,), -1e30, dtype=bias.dtype)])
    return weight, bias.reshape(1, Cp), C


def linear_logsoftmax(x, weight_p, bias_p, nclass, *, tb_max=512):
    """x: [B, D]; weight_p: [Cp, D] (padded, PyTorch layout); bias_p: [1, Cp].
    Returns log_softmax(x @ W^T + b, axis=1) of shape [B, nclass]."""
    B, D = x.shape
    Cp = weight_p.shape[0]
    dsize = jnp.dtype(x.dtype).itemsize

    # --- batch tile size: multiple of 8 sublanes (f32) / 16 (bf16), capped by
    # a conservative VMEM budget so it fits v7x's 64 MiB physical VMEM.
    sub = 8 if dsize >= 4 else 32 // dsize

    def vmem_bytes(tb):
        return (2 * tb * D * dsize          # x tile, double-buffered
                + 2 * tb * Cp * dsize       # out tile, double-buffered
                + 2 * Cp * D * dsize        # weight (resident; count 2x safe)
                + 2 * Cp * 4)               # bias

    budget = 40 * 1024 * 1024
    if B <= sub:
        TB = B
    else:
        TB = max(sub, (min(tb_max, B) // sub) * sub)
        while TB > sub and vmem_bytes(TB) > budget:
            TB //= 2
        TB = max(sub, (TB // sub) * sub)

    grid = (pl.cdiv(B, TB),)

    cost = pl.CostEstimate(
        flops=2 * B * D * Cp,
        transcendentals=B * Cp,
        bytes_accessed=(B * D + Cp * D + Cp + B * Cp) * dsize,
    )

    out_padded = pl.pallas_call(
        linear_logsoftmax_kernel,
        out_shape=jax.ShapeDtypeStruct((B, Cp), x.dtype),
        grid_spec=pltpu.PrefetchScalarGridSpec(
            num_scalar_prefetch=0,
            grid=grid,
            in_specs=[
                pl.BlockSpec((TB, D), lambda i: (i, 0)),   # x: tiled over batch
                pl.BlockSpec((Cp, D), lambda i: (0, 0)),   # weight: resident
                pl.BlockSpec((1, Cp), lambda i: (0, 0)),   # bias: resident
            ],
            out_specs=pl.BlockSpec((TB, Cp), lambda i: (i, 0)),
        ),
        compiler_params=pltpu.CompilerParams(
            dimension_semantics=("parallel",),
            vmem_limit_bytes=48 * 1024 * 1024,
        ),
        cost_estimate=cost,
    )(x, weight_p, bias_p)

    return out_padded[:, :nclass]


if __name__ == "__main__":
    # Small shapes consistent with the module's forward: x is [batch, input_dim].
    batch, input_dim, nclass = 8, 32, 16

    key = jax.random.PRNGKey(0)
    kx, kw, kb = jax.random.split(key, 3)

    x = jax.random.normal(kx, (batch, input_dim), dtype=jnp.float32)
    # Deterministic "nn.Linear"-style parameters (uniform in +/- 1/sqrt(D)).
    bound = 1.0 / jnp.sqrt(jnp.float32(input_dim))
    weight = jax.random.uniform(kw, (nclass, input_dim), jnp.float32, -bound, bound)
    bias = jax.random.uniform(kb, (nclass,), jnp.float32, -bound, bound)

    # One-time parameter prep (init-time, not per forward call).
    w_p, b_p, C = prepare_params(weight, bias)

    out = linear_logsoftmax(x, w_p, b_p, C)
    out = jax.block_until_ready(out)

    # Cross-check against a pure-JAX reference of the original module.
    ref = jax.nn.log_softmax(x @ weight.T + bias, axis=1)
    assert out.shape == (batch, nclass)
    assert jnp.allclose(out, ref, atol=1e-5, rtol=1e-5)

    print("KERNEL_OK")
</pallas_src>

<mosaic_0001>
module attributes {stable_mosaic.version = 11 : i64} {
  func.func @linear_logsoftmax_kernel(%arg0: i32, %arg1: memref<8x32xf32, #tpu.memory_space<vmem>>, %arg2: memref<128x32xf32, #tpu.memory_space<vmem>>, %arg3: memref<1x128xf32, #tpu.memory_space<vmem>>, %arg4: memref<8x128xf32, #tpu.memory_space<vmem>>) attributes {dimension_semantics = [#tpu.dimension_semantics<parallel>], iteration_bounds = array<i64: 1>, scalar_prefetch = 0 : i64, scratch_operands = 0 : i64, tpu.core_type = #tpu.core_type<tc>, window_params = [{transform_indices = @transform_0, window_bounds = array<i64: 8, 32>}, {pipeline_mode = #tpu.pipeline_mode<synchronous>, transform_indices = @transform_1, window_bounds = array<i64: 128, 32>}, {pipeline_mode = #tpu.pipeline_mode<synchronous>, transform_indices = @transform_2, window_bounds = array<i64: 1, 128>}, {transform_indices = @transform_3, window_bounds = array<i64: 8, 128>}]} {
    %c0 = arith.constant 0 : index
    %c0_0 = arith.constant 0 : index
    %0 = vector.load %arg1[%c0, %c0_0] : memref<8x32xf32, #tpu.memory_space<vmem>>, vector<8x32xf32>
    %c0_1 = arith.constant 0 : index
    %c0_2 = arith.constant 0 : index
    %1 = vector.load %arg2[%c0_1, %c0_2] : memref<128x32xf32, #tpu.memory_space<vmem>>, vector<128x32xf32>
    %c0_3 = arith.constant 0 : index
    %c0_4 = arith.constant 0 : index
    %2 = vector.load %arg3[%c0_3, %c0_4] : memref<1x128xf32, #tpu.memory_space<vmem>>, vector<1x128xf32>
    %cst = arith.constant dense<0.000000e+00> : vector<8x128xf32>
    %3 = tpu.matmul %0, %1, %cst {dimension_numbers = #tpu.dot_dimension_numbers<[1], [1], [0], [0], [0, 0, 1, 0], [], []>} : vector<8x32xf32>, vector<128x32xf32>, vector<8x128xf32> -> vector<8x128xf32>
    %4 = vector.broadcast %2 : vector<1x128xf32> to vector<8x128xf32>
    %5 = arith.addf %3, %4 : vector<8x128xf32>
    %cst_5 = arith.constant dense<0xFF800000> : vector<8xf32>
    %6 = vector.multi_reduction <maximumf>, %5, %cst_5 [1] : vector<8x128xf32> to vector<8xf32>
    %7 = vector.shape_cast %6 : vector<8xf32> to vector<8x1xf32>
    %8 = vector.broadcast %7 : vector<8x1xf32> to vector<8x128xf32>
    %9 = arith.subf %5, %8 : vector<8x128xf32>
    %10 = math.exp %9 : vector<8x128xf32>
    %cst_6 = arith.constant dense<0.000000e+00> : vector<8xf32>
    %11 = vector.multi_reduction <add>, %10, %cst_6 [1] : vector<8x128xf32> to vector<8xf32>
    %12 = vector.shape_cast %11 : vector<8xf32> to vector<8x1xf32>
    %13 = math.log %12 : vector<8x1xf32>
    %14 = vector.broadcast %13 : vector<8x1xf32> to vector<8x128xf32>
    %15 = arith.subf %9, %14 : vector<8x128xf32>
    %c0_7 = arith.constant 0 : index
    %c0_8 = arith.constant 0 : index
    %16 = vector.load %arg4[%c0_7, %c0_8] : memref<8x128xf32, #tpu.memory_space<vmem>>, vector<8x128xf32>
    tpu.vector_store %arg4[%c0_7, %c0_8], %15 {strides = array<i32>} : memref<8x128xf32, #tpu.memory_space<vmem>>, vector<8x128xf32>,
    return
  }
  func.func @transform_0(%arg0: i32) -> (i32, i32) {
    %c0_i32 = arith.constant 0 : i32
    %c0_i32_0 = arith.constant 0 : i32
    return %arg0, %c0_i32 : i32, i32
  }
  func.func @transform_1(%arg0: i32) -> (i32, i32) {
    %c0_i32 = arith.constant 0 : i32
    %c0_i32_0 = arith.constant 0 : i32
    %c0_i32_1 = arith.constant 0 : i32
    return %c0_i32, %c0_i32_0 : i32, i32
  }
  func.func @transform_2(%arg0: i32) -> (i32, i32) {
    %c0_i32 = arith.constant 0 : i32
    %c0_i32_0 = arith.constant 0 : i32
    %c0_i32_1 = arith.constant 0 : i32
    return %c0_i32, %c0_i32_0 : i32, i32
  }
  func.func @transform_3(%arg0: i32) -> (i32, i32) {
    %c0_i32 = arith.constant 0 : i32
    %c0_i32_0 = arith.constant 0 : i32
    return %arg0, %c0_i32 : i32, i32
  }
}

</mosaic_0001>

<llo_original>
// kernel: tpu_custom_call.1
$region0: #{tpu_custom_call.1}
  #allocation0 [shape = 'u32[]', space=smem, size = 0x4, offset = 0x4, fixed_abs, tag = 'smem constant byte address 0x4 - core index']
  #allocation1 [shape = 'u32[144,128]{1,0:T(1,128)}', space=vmem, size = 0x12000, scoped, tag = 'internal scratch']
  %s0 = inlined_call_operand.vmem [shape: f32[8,32], index: 0, kind: input, shape index: {}]
  %s1 = inlined_call_operand.vmem [shape: f32[128,32], index: 1, kind: input, shape index: {}]
  %s2 = inlined_call_operand.vmem [shape: f32[1,128], index: 2, kind: input, shape index: {}]
  %s3 = inlined_call_operand.hbm [shape: f32[8,128], index: 3, kind: output, shape index: {}]
  %s4 = sld [smem:[#allocation0]]
  $region22: #{tpu_custom_call.1} parent=0
    _
  %s6 = ssub.s32 1, %s4
  %s7 = scalar_select 0, %s6, %s4
  $region1: #{tpu_custom_call.1} parent=0
    #allocation2 [shape = 'u8[4096]{0}', space=vmem, size = 0x1000, scoped, tag = 'output window, operand 0, single buffered']
    #allocation3 [shape = 's32[1]{0}', space=sflag, size = 0x4, scoped, tag = 'scoped memory for tpu_custom_call.1']
    %8 = vsyncpa [#allocation3], 0
    // Predicated region
    $region2: #{tpu_custom_call.1} parent=1 // pred_check
      _
    $region3: #{tpu_custom_call.1} parent=1 // pred_check_branch
      %10 = sbr.rel (0) target = $region5
    $region4: #{tpu_custom_call.1} parent=1 // pred_region
      _
    $region5: #{tpu_custom_call.1} parent=1 // pred_fallthru
      _
    // Predicated region
    $region6: #{tpu_custom_call.1} parent=1 // pred_check
      _
    $region7: #{tpu_custom_call.1} parent=1 // pred_check_branch
      %12 = sbr.rel (0) target = $region9
    $region8: #{tpu_custom_call.1} parent=1 // pred_region
      _
    $region9: #{tpu_custom_call.1} parent=1 // pred_fallthru
      _
    // Predicated region
    $region10: #{tpu_custom_call.1} parent=1 // pred_check
      _
    $region11: #{tpu_custom_call.1} parent=1 // pred_check_branch
      %14 = sbr.rel (0) target = $region13
    $region12: #{tpu_custom_call.1} parent=1 // pred_region
      _
    $region13: #{tpu_custom_call.1} parent=1 // pred_fallthru
      _
    %v15 = vld [vmem:[%s0] sm:$0xff]
    %v16 = vld [vmem:[%s1] sm:$0xff]
    %v17 = vld [vmem:[%s1 + $0x8] sm:$0xff]
    %v18 = vld [vmem:[%s1 + $0x10] sm:$0xff]
    %v19 = vld [vmem:[%s1 + $0x18] sm:$0xff]
    %v20 = vld [vmem:[%s1 + $0x20] sm:$0xff]
    %v21 = vld [vmem:[%s1 + $0x28] sm:$0xff]
    %v22 = vld [vmem:[%s1 + $0x30] sm:$0xff]
    %v23 = vld [vmem:[%s1 + $0x38] sm:$0xff]
    %v24 = vld [vmem:[%s1 + $0x40] sm:$0xff]
    %v25 = vld [vmem:[%s1 + $0x48] sm:$0xff]
    %v26 = vld [vmem:[%s1 + $0x50] sm:$0xff]
    %v27 = vld [vmem:[%s1 + $0x58] sm:$0xff]
    %v28 = vld [vmem:[%s1 + $0x60] sm:$0xff]
    %v29 = vld [vmem:[%s1 + $0x68] sm:$0xff]
    %v30 = vld [vmem:[%s1 + $0x70] sm:$0xff]
    %v31 = vld [vmem:[%s1 + $0x78] sm:$0xff]
    %v32 = vld [vmem:[%s2] sm:$0x1]
    %v34 = vlaneseq
    %v35 = vshrl.u32 %v34, 7
    %v36 = vsub.s32 0, %v35
    %v37 = vrot.slane %v32, %v36
    %vm39 = vcmask 261120
    %v41 = vsel %vm39, %v15, 0
    %v44 = vsel %vm39, %v16, 0
    %v47 = vsel %vm39, %v17, 0
    %v50 = vsel %vm39, %v18, 0
    %v53 = vsel %vm39, %v19, 0
    %v56 = vsel %vm39, %v20, 0
    %v59 = vsel %vm39, %v21, 0
    %v62 = vsel %vm39, %v22, 0
    %v65 = vsel %vm39, %v23, 0
    %v68 = vsel %vm39, %v24, 0
    %v71 = vsel %vm39, %v25, 0
    %v74 = vsel %vm39, %v26, 0
    %v77 = vsel %vm39, %v27, 0
    %v80 = vsel %vm39, %v28, 0
    %v83 = vsel %vm39, %v29, 0
    %v86 = vsel %vm39, %v30, 0
    %v89 = vsel %vm39, %v31, 0
    %91 = vmatprep.subr.mxu0 0.0
    %92 = vmatpush1.xpose.msra.mxu0 %v44
    %93 = vmatprep.subr.mxu0 0.0
    %94 = vmatpush1.xpose.msra.mxu0 %v47
    %95 = vmatprep.subr.mxu0 0.0
    %96 = vmatpush1.xpose.msra.mxu0 %v50
    %97 = vmatprep.subr.mxu0 0.0
    %98 = vmatpush1.xpose.msra.mxu0 %v53
    %99 = vmatprep.subr.mxu0 0.0
    %100 = vmatpush1.xpose.msra.mxu0 %v56
    %101 = vmatprep.subr.mxu0 0.0
    %102 = vmatpush1.xpose.msra.mxu0 %v59
    %103 = vmatprep.subr.mxu0 0.0
    %104 = vmatpush1.xpose.msra.mxu0 %v62
    %105 = vmatprep.subr.mxu0 0.0
    %106 = vmatpush1.xpose.msra.mxu0 %v65
    %107 = vmatprep.subr.mxu0 0.0
    %108 = vmatpush1.xpose.msra.mxu0 %v68
    %109 = vmatprep.subr.mxu0 0.0
    %110 = vmatpush1.xpose.msra.mxu0 %v71
    %111 = vmatprep.subr.mxu0 0.0
    %112 = vmatpush1.xpose.msra.mxu0 %v74
    %113 = vmatprep.subr.mxu0 0.0
    %114 = vmatpush1.xpose.msra.mxu0 %v77
    %115 = vmatprep.subr.mxu0 0.0
    %116 = vmatpush1.xpose.msra.mxu0 %v80
    %117 = vmatprep.subr.mxu0 0.0
    %118 = vmatpush1.xpose.msra.mxu0 %v83
    %119 = vmatprep.subr.mxu0 0.0
    %120 = vmatpush1.xpose.msra.mxu0 %v86
    %121 = vmatprep.subr.mxu0 0.0
    %122 = vmatpush1.xpose.msra.mxu0 %v89
    %123 = vmatprep.subr.mxu0 0.0
    %124 = vmatpush1.xpose.msra.mxu0 0.0
    %125 = vmatprep.subr.mxu0 0.0
    %126 = vmatpush1.xpose.msra.mxu0 0.0
    %127 = vmatprep.subr.mxu0 0.0
    %128 = vmatpush1.xpose.msra.mxu0 0.0
    %129 = vmatprep.subr.mxu0 0.0
    %130 = vmatpush1.xpose.msra.mxu0 0.0
    %131 = vmatprep.subr.mxu0 0.0
    %132 = vmatpush1.xpose.msra.mxu0 0.0
    %133 = vmatprep.subr.mxu0 0.0
    %134 = vmatpush1.xpose.msra.mxu0 0.0
    %135 = vmatprep.subr.mxu0 0.0
    %136 = vmatpush1.xpose.msra.mxu0 0.0
    %137 = vmatprep.subr.mxu0 0.0
    %138 = vmatpush1.xpose.msra.mxu0 0.0
    %139 = vmatprep.subr.mxu0 0.0
    %140 = vmatpush1.xpose.msra.mxu0 0.0
    %141 = vmatprep.subr.mxu0 0.0
    %142 = vmatpush1.xpose.msra.mxu0 0.0
    %143 = vmatprep.subr.mxu0 0.0
    %144 = vmatpush1.xpose.msra.mxu0 0.0
    %145 = vmatprep.subr.mxu0 0.0
    %146 = vmatpush1.xpose.msra.mxu0 0.0
    %147 = vmatprep.subr.mxu0 0.0
    %148 = vmatpush1.xpose.msra.mxu0 0.0
    %149 = vmatprep.subr.mxu0 0.0
    %150 = vmatpush1.xpose.msra.mxu0 0.0
    %151 = vmatprep.subr.mxu0 0.0
    %152 = vmatpush1.xpose.msra.mxu0 0.0
    %153 = vmatprep.subr.mxu0 0.0
    %154 = vmatpush1.xpose.msra.mxu0 0.0
    %155 = vmatprep.mubr.f32.mxu0 0.0
    %156 = vmatmul.mubr.f32.gmra.mrb[0].mxu0 %v41
    %v157 = vpop.f32.mrb[0].mxu0
    %v158 = vadd.f32 %v37, %v157
    %v159 = vpop.f32.mrb[0].mxu0
    %160 = vdwg.mxu0
    %161 = vmax.xlane.f32.xlu0 %v158
    %v162 = vpop.xlane.xlu0 %161
    %v163 = vsub.f32 %v158, %v162
    %v164 = vmul.f32 %v163, 1.442695
    %v165 = vpow.pop %v164
    %166 = vadd.xlane.f32.xlu0 %v165
    %v167 = vpop.xlane.xlu0 %166
    %v168 = vlog2.pop %v167
    %v169 = vmul.f32 %v168, 0.6931472
    %v170 = vsub.f32 %v163, %v169
    %171 = vst [vmem:[#allocation2] sm:$0xff] %v170
    // Predicated region
    $region14: #{tpu_custom_call.1} parent=1 // pred_check
      _
    $region15: #{tpu_custom_call.1} parent=1 // pred_check_branch
      %173 = sbr.rel (0) target = $region17
    $region16: #{tpu_custom_call.1} parent=1 // pred_region
      %s175 = ssub.s32 128, 128
      %176 = vsyncadd [#allocation3], %s175
      %s178 = sshll.u32 [#allocation2], 4
      %s179 = int_to_ptr.vmem [resolvable:$true] %s178
      %181 = dma.vmem_to_hbm [thread:$0]  %s179, 128, %s3, [#allocation3]
    $region17: #{tpu_custom_call.1} parent=1 // pred_fallthru
      _
    // Predicated region
    $region18: #{tpu_custom_call.1} parent=1 // pred_check
      _
    $region19: #{tpu_custom_call.1} parent=1 // pred_check_branch
      %183 = sbr.rel (0) target = $region21
    $region20: #{tpu_custom_call.1} parent=1 // pred_region
      %184 = dma.done [#allocation3], 128
    $region21: #{tpu_custom_call.1} parent=1 // pred_fallthru
      _
    %185 = vsyncpa [#allocation3], 1

</llo_original>
